<compile_context>
chip_gen: v7x
topology: tpu7x:2x2x1
jax: 0.10.0
libtpu: 0.0.40
codegen_flags: <defaults>
</compile_context>

<pallas_src>
import jax
import jax.numpy as jnp
from jax.experimental import pallas as pl
from jax.experimental.pallas import tpu as pltpu

_LANE = 128


def _horner_coefs(derivatives):
    """coef[i] = derivatives[i] / i!  as Python floats (trace-time constants)."""
    coefs = []
    fact = 1
    for i, d in enumerate(derivatives):
        if i > 0:
            fact *= i
        coefs.append(float(d) / float(fact))
    return coefs


def _make_taylor_kernel(coefs, a):
    a = float(a)

    def kernel(x_ref, y_ref):
        # Compute in f32 regardless of I/O dtype (v5e has no bf16 VALU);
        # I/O stays in the original dtype so HBM traffic is unchanged.
        t = x_ref[...].astype(jnp.float32) - a
        if coefs:
            acc = jnp.full_like(t, coefs[-1])
            for c in reversed(coefs[:-1]):   # Horner: acc = acc * t + c
                acc = acc * t + c
        else:
            acc = jnp.zeros_like(t)
        y_ref[...] = acc.astype(y_ref.dtype)

    return kernel


def _horner_jnp(x, coefs, a):
    """Plain-jnp Horner evaluation for the (tiny) non-128-aligned tail."""
    t = x.astype(jnp.float32) - jnp.float32(a)
    if not coefs:
        return jnp.zeros_like(x)
    acc = jnp.full_like(t, coefs[-1])
    for c in reversed(coefs[:-1]):
        acc = acc * t + c
    return acc.astype(x.dtype)


def poly_taylor_net(x, derivatives, a, *, block_rows=1024):
    """Pallas implementation of PolyTaylorNet.forward (elementwise, NCHW-agnostic)."""
    coefs = _horner_coefs(derivatives)
    orig_shape = x.shape
    orig_dtype = x.dtype

    flat = x.reshape(-1)
    total = flat.shape[0]

    main = (total // _LANE) * _LANE      # largest 128-aligned prefix
    rem = total - main

    outs = []
    if main:
        rows = main // _LANE
        # Block sublane count: multiple of 8 and <= rows (ragged final block
        # is masked by Pallas); for very small inputs use the full row count.
        if rows >= 8:
            br = min(block_rows, (rows // 8) * 8)
        else:
            br = rows
        grid = (pl.cdiv(rows, br),)

        y2d = pl.pallas_call(
            _make_taylor_kernel(coefs, a),
            out_shape=jax.ShapeDtypeStruct((rows, _LANE), orig_dtype),
            grid_spec=pltpu.PrefetchScalarGridSpec(
                num_scalar_prefetch=0,
                grid=grid,
                in_specs=[pl.BlockSpec((br, _LANE), lambda i: (i, 0))],
                out_specs=pl.BlockSpec((br, _LANE), lambda i: (i, 0)),
            ),
            compiler_params=pltpu.CompilerParams(
                dimension_semantics=("parallel",),   # shards across TCs on v7x
            ),
        )(flat[:main].reshape(rows, _LANE))
        outs.append(y2d.reshape(-1))

    if rem:
        outs.append(_horner_jnp(flat[main:], coefs, a))

    y = outs[0] if len(outs) == 1 else jnp.concatenate(outs)
    return y.reshape(orig_shape)


def poly_taylor_ref(x, derivatives, a):
    """Plain-JAX reference mirroring the PyTorch forward exactly."""
    n_coef = len(derivatives)
    factorials = [1] * n_coef
    for n in range(1, n_coef):
        factorials[n] = factorials[n - 1] * n
    y = jnp.zeros_like(x)
    for i, der in enumerate(derivatives):
        y = y + der * (x - a) ** i / factorials[i]
    return y


if __name__ == "__main__":
    # Deterministic "parameters" (module __init__ takes them as plain numbers).
    derivatives = [1.0, 2.0, -0.5, 3.0, 0.25]   # n_coef = 5
    a = 0.5

    key = jax.random.PRNGKey(0)

    # Primary test: NCHW input, 128-divisible element count.
    x = jax.random.normal(key, (2, 4, 16, 16), dtype=jnp.float32)
    y = jax.block_until_ready(poly_taylor_net(x, derivatives, a))
    y_ref = poly_taylor_ref(x, derivatives, a)
    assert y.shape == x.shape and y.dtype == x.dtype
    assert jnp.allclose(y, y_ref, atol=1e-5, rtol=1e-5), "mismatch vs reference"

    # Secondary test: non-128-divisible size exercises ragged block + jnp tail.
    x2 = jax.random.normal(jax.random.PRNGKey(1), (2, 3, 50), dtype=jnp.float32)
    y2 = jax.block_until_ready(poly_taylor_net(x2, derivatives, a))
    y2_ref = poly_taylor_ref(x2, derivatives, a)
    assert jnp.allclose(y2, y2_ref, atol=1e-5, rtol=1e-5), "mismatch (ragged case)"

    print("KERNEL_OK")
</pallas_src>

<mosaic_0001>
module attributes {stable_mosaic.version = 11 : i64} {
  func.func @kernel(%arg0: i32, %arg1: memref<16x128xf32, #tpu.memory_space<vmem>>, %arg2: memref<16x128xf32, #tpu.memory_space<vmem>>) attributes {dimension_semantics = [#tpu.dimension_semantics<parallel>], iteration_bounds = array<i64: 1>, scalar_prefetch = 0 : i64, scratch_operands = 0 : i64, tpu.core_type = #tpu.core_type<tc>, window_params = [{transform_indices = @transform_0, window_bounds = array<i64: 16, 128>}, {transform_indices = @transform_1, window_bounds = array<i64: 16, 128>}]} {
    %c0 = arith.constant 0 : index
    %c0_0 = arith.constant 0 : index
    %0 = vector.load %arg1[%c0, %c0_0] : memref<16x128xf32, #tpu.memory_space<vmem>>, vector<16x128xf32>
    %cst = arith.constant 5.000000e-01 : f32
    %1 = vector.broadcast %cst : f32 to vector<16x128xf32>
    %2 = arith.subf %0, %1 : vector<16x128xf32>
    %cst_1 = arith.constant 0.010416667 : f32
    %3 = vector.broadcast %cst_1 : f32 to vector<16x128xf32>
    %4 = arith.mulf %3, %2 : vector<16x128xf32>
    %cst_2 = arith.constant 5.000000e-01 : f32
    %5 = vector.broadcast %cst_2 : f32 to vector<16x128xf32>
    %6 = arith.addf %4, %5 : vector<16x128xf32>
    %7 = arith.mulf %6, %2 : vector<16x128xf32>
    %cst_3 = arith.constant -2.500000e-01 : f32
    %8 = vector.broadcast %cst_3 : f32 to vector<16x128xf32>
    %9 = arith.addf %7, %8 : vector<16x128xf32>
    %10 = arith.mulf %9, %2 : vector<16x128xf32>
    %cst_4 = arith.constant 2.000000e+00 : f32
    %11 = vector.broadcast %cst_4 : f32 to vector<16x128xf32>
    %12 = arith.addf %10, %11 : vector<16x128xf32>
    %13 = arith.mulf %12, %2 : vector<16x128xf32>
    %cst_5 = arith.constant 1.000000e+00 : f32
    %14 = vector.broadcast %cst_5 : f32 to vector<16x128xf32>
    %15 = arith.addf %13, %14 : vector<16x128xf32>
    %c0_6 = arith.constant 0 : index
    %c0_7 = arith.constant 0 : index
    %16 = vector.load %arg2[%c0_6, %c0_7] : memref<16x128xf32, #tpu.memory_space<vmem>>, vector<16x128xf32>
    tpu.vector_store %arg2[%c0_6, %c0_7], %15 {strides = array<i32>} : memref<16x128xf32, #tpu.memory_space<vmem>>, vector<16x128xf32>,
    return
  }
  func.func @transform_0(%arg0: i32) -> (i32, i32) {
    %c0_i32 = arith.constant 0 : i32
    %c0_i32_0 = arith.constant 0 : i32
    return %arg0, %c0_i32 : i32, i32
  }
  func.func @transform_1(%arg0: i32) -> (i32, i32) {
    %c0_i32 = arith.constant 0 : i32
    %c0_i32_0 = arith.constant 0 : i32
    return %arg0, %c0_i32 : i32, i32
  }
}

</mosaic_0001>

<llo_original>
// kernel: tpu_custom_call.1
$region0: #{tpu_custom_call.1}
  #allocation0 [shape = 'u32[]', space=smem, size = 0x4, offset = 0x4, fixed_abs, tag = 'smem constant byte address 0x4 - core index']
  #allocation1 [shape = 'u32[144,128]{1,0:T(1,128)}', space=vmem, size = 0x12000, scoped, tag = 'internal scratch']
  %s0 = inlined_call_operand.hbm [shape: f32[16,128], index: 0, kind: input, shape index: {}]
  %s1 = inlined_call_operand.hbm [shape: f32[16,128], index: 1, kind: output, shape index: {}]
  %s2 = sld [smem:[#allocation0]]
  $region18: #{tpu_custom_call.1} parent=0
    _
  %s4 = ssub.s32 1, %s2
  %s5 = scalar_select 0, %s4, %s2
  $region1: #{tpu_custom_call.1} parent=0
    #allocation2 [shape = 'u8[8192]{0}', space=vmem, size = 0x2000, scoped, tag = 'input window, operand 0, single buffered']
    #allocation3 [shape = 's32[1]{0}', space=sflag, size = 0x4, scoped, tag = 'scoped memory for tpu_custom_call.1']
    #allocation4 [shape = 's32[1]{0}', space=sflag, size = 0x4, scoped, tag = 'scoped memory for tpu_custom_call.1']
    #allocation5 [shape = 'u8[8192]{0}', space=vmem, size = 0x2000, scoped, tag = 'output window, operand 0, single buffered']
    %6 = vsyncpa [#allocation3], 0
    %7 = vsyncpa [#allocation4], 0
    // Predicated region
    $region2: #{tpu_custom_call.1} parent=1 // pred_check
      _
    $region3: #{tpu_custom_call.1} parent=1 // pred_check_branch
      %9 = sbr.rel (0) target = $region5
    $region4: #{tpu_custom_call.1} parent=1 // pred_region
      %s11 = ssub.s32 256, 256
      %12 = vsyncadd [#allocation3], %s11
      %s13 = sshll.u32 [#allocation2], 4
      %s14 = int_to_ptr.vmem [resolvable:$true] %s13
      %19 = dma.hbm_to_vmem [thread:$0]  %s0, 256, %s14, [#allocation3], 128, 128, 8
    $region5: #{tpu_custom_call.1} parent=1 // pred_fallthru
      _
    // Predicated region
    $region6: #{tpu_custom_call.1} parent=1 // pred_check
      _
    $region7: #{tpu_custom_call.1} parent=1 // pred_check_branch
      %21 = sbr.rel (0) target = $region9
    $region8: #{tpu_custom_call.1} parent=1 // pred_region
      %22 = dma.done [#allocation3], 256
    $region9: #{tpu_custom_call.1} parent=1 // pred_fallthru
      _
    %v23 = vld [vmem:[#allocation2] sm:$0xff]
    %v24 = vld [vmem:[#allocation2 + $0x8] sm:$0xff]
    %v25 = vsub.f32 %v23, 0.5
    %v26 = vsub.f32 %v24, 0.5
    %v27 = vmul.f32 %v25, 0.010416667
    %v28 = vmul.f32 %v26, 0.010416667
    %v29 = vadd.f32 %v27, 0.5
    %v30 = vadd.f32 %v28, 0.5
    %v31 = vmul.f32 %v29, %v25
    %v32 = vmul.f32 %v30, %v26
    %v33 = vadd.f32 %v31, -0.25
    %v34 = vadd.f32 %v32, -0.25
    %v35 = vmul.f32 %v33, %v25
    %v36 = vmul.f32 %v34, %v26
    %v37 = vadd.f32 %v35, 2.0
    %v38 = vadd.f32 %v36, 2.0
    %v39 = vmul.f32 %v37, %v25
    %v40 = vmul.f32 %v38, %v26
    %v41 = vadd.f32 %v39, 1.0
    %v42 = vadd.f32 %v40, 1.0
    %43 = vst [vmem:[#allocation5] sm:$0xff] %v41
    %44 = vst [vmem:[#allocation5 + $0x8] sm:$0xff] %v42
    // Predicated region
    $region10: #{tpu_custom_call.1} parent=1 // pred_check
      _
    $region11: #{tpu_custom_call.1} parent=1 // pred_check_branch
      %46 = sbr.rel (0) target = $region13
    $region12: #{tpu_custom_call.1} parent=1 // pred_region
      %s48 = ssub.s32 256, 256
      %49 = vsyncadd [#allocation4], %s48
      %s50 = sshll.u32 [#allocation5], 4
      %s51 = int_to_ptr.vmem [resolvable:$true] %s50
      %56 = dma.vmem_to_hbm [thread:$0]  %s51, 256, %s1, [#allocation4], 128, 128, 8
    $region13: #{tpu_custom_call.1} parent=1 // pred_fallthru
      _
    // Predicated region
    $region14: #{tpu_custom_call.1} parent=1 // pred_check
      _
    $region15: #{tpu_custom_call.1} parent=1 // pred_check_branch
      %58 = sbr.rel (0) target = $region17
    $region16: #{tpu_custom_call.1} parent=1 // pred_region
      %59 = dma.done [#allocation4], 256
    $region17: #{tpu_custom_call.1} parent=1 // pred_fallthru
      _
    %60 = vsyncpa [#allocation3], 1
    %61 = vsyncpa [#allocation4], 1

</llo_original>
